<compile_context>
chip_gen: v7x
topology: tpu7x:2x2x1
jax: 0.10.0
libtpu: 0.0.40
codegen_flags: <defaults>
</compile_context>

<pallas_src>
import functools
import math

import jax
import jax.numpy as jnp
from jax.experimental import pallas as pl
from jax.experimental.pallas import tpu as pltpu

_VMEM_LIMIT_BYTES = 48 * 1024 * 1024  # comfortably under v7x's 64 MiB physical VMEM


def _cparams(dimension_semantics):
    return pltpu.CompilerParams(
        dimension_semantics=dimension_semantics,
        vmem_limit_bytes=_VMEM_LIMIT_BYTES,
    )


def _pick_tile(n, target, align):
    """Largest multiple of `align` that divides n and is <= target; else n (full dim)."""
    if n <= target:
        return n
    t = (min(target, n) // align) * align
    while t >= align:
        if n % t == 0:
            return t
        t -= align
    return n


def _gelu(x):
    # TODO(synk): PyTorch F.gelu defaults to the exact erf form; the tanh approximation
    # (max abs err ~3e-4) is used here since erf is not guaranteed to lower in Mosaic.
    c = 0.7978845608028654  # sqrt(2/pi)
    return 0.5 * x * (1.0 + jnp.tanh(c * (x + 0.044715 * x * x * x)))


# ----------------------------------------------------------------------------
# Kernel 1: tiled matmul + bias (+ optional GELU)
# ----------------------------------------------------------------------------
def _linear_kernel(x_ref, w_ref, b_ref, o_ref, acc_ref, *, activation):
    @pl.when(pl.program_id(2) == 0)
    def _():
        acc_ref[...] = jnp.zeros_like(acc_ref)

    acc_ref[...] += jnp.dot(x_ref[...], w_ref[...],
                            preferred_element_type=jnp.float32)

    @pl.when(pl.program_id(2) == pl.num_programs(2) - 1)
    def _():
        y = acc_ref[...] + b_ref[...].astype(jnp.float32)
        if activation == "gelu":
            y = _gelu(y)
        o_ref[...] = y.astype(o_ref.dtype)


def linear(x, w, b, *, activation=None, row_tile=256, col_tile=512, k_tile=512):
    """y = x @ w + b (optionally GELU).  x:[M,K], w:[K,N], b:[N]."""
    m, k = x.shape
    k2, n = w.shape
    assert k == k2 and b.shape == (n,)
    tm = _pick_tile(m, row_tile, 8)
    tk = _pick_tile(k, k_tile, 128)
    tn = _pick_tile(n, col_tile, 128)
    grid = (m // tm, n // tn, k // tk)  # reduction axis last
    return pl.pallas_call(
        functools.partial(_linear_kernel, activation=activation),
        out_shape=jax.ShapeDtypeStruct((m, n), x.dtype),
        grid=grid,
        in_specs=[
            pl.BlockSpec((tm, tk), lambda i, j, kk: (i, kk)),
            pl.BlockSpec((tk, tn), lambda i, j, kk: (kk, j)),
            pl.BlockSpec((1, tn), lambda i, j, kk: (0, j)),
        ],
        out_specs=pl.BlockSpec((tm, tn), lambda i, j, kk: (i, j)),
        scratch_shapes=[pltpu.VMEM((tm, tn), jnp.float32)],
        compiler_params=_cparams(("parallel", "parallel", "arbitrary")),
    )(x, w, b.reshape(1, n))


# ----------------------------------------------------------------------------
# Kernel 2: matmul + bias fused with residual-add + LayerNorm epilogue
# ----------------------------------------------------------------------------
def _linear_res_ln_kernel(x_ref, w_ref, b_ref, res_ref, g_ref, bt_ref,
                          o_ref, acc_ref, *, eps):
    @pl.when(pl.program_id(1) == 0)
    def _():
        acc_ref[...] = jnp.zeros_like(acc_ref)

    acc_ref[...] += jnp.dot(x_ref[...], w_ref[...],
                            preferred_element_type=jnp.float32)

    @pl.when(pl.program_id(1) == pl.num_programs(1) - 1)
    def _():
        # TODO(synk): training-mode Dropout(p_drop) on the matmul output would need
        # pltpu.prng_* masking here; eval mode (identity) is implemented.
        r = (acc_ref[...] + b_ref[...].astype(jnp.float32)
             + res_ref[...].astype(jnp.float32))
        mean = jnp.mean(r, axis=-1, keepdims=True)
        c = r - mean
        var = jnp.mean(c * c, axis=-1, keepdims=True)
        normed = c * jax.lax.rsqrt(var + eps)
        out = (normed * g_ref[...].astype(jnp.float32)
               + bt_ref[...].astype(jnp.float32))
        o_ref[...] = out.astype(o_ref.dtype)


def linear_residual_layernorm(x, w, b, residual, gamma, beta, *, eps=1e-5,
                              row_tile=256, k_tile=512):
    """LayerNorm(residual + (x @ w + b)); LayerNorm reduces over the last (N) axis."""
    m, k = x.shape
    k2, n = w.shape
    assert k == k2 and residual.shape == (m, n)
    tm = _pick_tile(m, row_tile, 8)
    tk = _pick_tile(k, k_tile, 128)
    grid = (m // tm, k // tk)  # N (d_model) kept whole so the LN reduction is in-tile
    return pl.pallas_call(
        functools.partial(_linear_res_ln_kernel, eps=eps),
        out_shape=jax.ShapeDtypeStruct((m, n), residual.dtype),
        grid=grid,
        in_specs=[
            pl.BlockSpec((tm, tk), lambda i, kk: (i, kk)),
            pl.BlockSpec((tk, n), lambda i, kk: (kk, 0)),
            pl.BlockSpec((1, n), lambda i, kk: (0, 0)),
            pl.BlockSpec((tm, n), lambda i, kk: (i, 0)),
            pl.BlockSpec((1, n), lambda i, kk: (0, 0)),
            pl.BlockSpec((1, n), lambda i, kk: (0, 0)),
        ],
        out_specs=pl.BlockSpec((tm, n), lambda i, kk: (i, 0)),
        scratch_shapes=[pltpu.VMEM((tm, n), jnp.float32)],
        compiler_params=_cparams(("parallel", "arbitrary")),
    )(x, w, b.reshape(1, n), residual, gamma.reshape(1, n), beta.reshape(1, n))


# ----------------------------------------------------------------------------
# Kernel 3: multi-head self-attention core (per batch*head)
# ----------------------------------------------------------------------------
def _attention_kernel(q_ref, k_ref, v_ref, o_ref, s_ref, *, scale):
    q = q_ref[0].astype(jnp.float32)  # (S, Dk)
    k = k_ref[0].astype(jnp.float32)  # (S, Dk)
    v = v_ref[0]                      # (S, Dk)
    # scores = Q @ K^T * scale  (contract Dk of both operands, no explicit transpose)
    s = jax.lax.dot_general(q, k, (((1,), (1,)), ((), ())),
                            preferred_element_type=jnp.float32) * scale
    # TODO(synk): optional attention mask (masked_fill(mask==0, -inf)) not implemented;
    # the module's default mask=None path is what this kernel covers.
    m = jnp.max(s, axis=-1, keepdims=True)
    p = jnp.exp(s - m)
    p = p / jnp.sum(p, axis=-1, keepdims=True)
    s_ref[0] = p.astype(s_ref.dtype)
    o_ref[0] = jnp.dot(p.astype(v.dtype), v,
                       preferred_element_type=jnp.float32).astype(o_ref.dtype)


def attention(q, k, v, *, scale):
    """q,k,v: [B*H, S, Dk] -> (attn_out [B*H,S,Dk], attn_probs [B*H,S,S])."""
    bh, s, dk = q.shape
    qkv_spec = pl.BlockSpec((1, s, dk), lambda h: (h, 0, 0))
    return pl.pallas_call(
        functools.partial(_attention_kernel, scale=scale),
        out_shape=(jax.ShapeDtypeStruct((bh, s, dk), q.dtype),
                   jax.ShapeDtypeStruct((bh, s, s), q.dtype)),
        grid=(bh,),
        in_specs=[qkv_spec, qkv_spec, qkv_spec],
        out_specs=(pl.BlockSpec((1, s, dk), lambda h: (h, 0, 0)),
                   pl.BlockSpec((1, s, s), lambda h: (h, 0, 0))),
        compiler_params=_cparams(("parallel",)),
    )(q, k, v)


# ----------------------------------------------------------------------------
# Encoder forward
# ----------------------------------------------------------------------------
def encoder_forward(x, params, *, n_heads, eps=1e-5):
    b, s, d = x.shape
    h = n_heads
    dk = d // h
    x2 = x.reshape(b * s, d)

    # Fused QKV projection: one matmul over x instead of three (1/3 the x HBM reads).
    w_qkv = jnp.concatenate([params["wq"], params["wk"], params["wv"]], axis=1)
    b_qkv = jnp.concatenate([params["bq"], params["bk"], params["bv"]], axis=0)
    qkv = linear(x2, w_qkv, b_qkv)                               # (B*S, 3D)
    q2, k2, v2 = qkv[:, :d], qkv[:, d:2 * d], qkv[:, 2 * d:]

    def split_heads(t):
        return t.reshape(b, s, h, dk).transpose(0, 2, 1, 3).reshape(b * h, s, dk)

    scale = 1.0 / math.sqrt(d / h)   # PyTorch uses float d_k = d_model / n_heads
    attn_out, attn_probs = attention(split_heads(q2), split_heads(k2),
                                     split_heads(v2), scale=scale)
    attn_out = (attn_out.reshape(b, h, s, dk)
                .transpose(0, 2, 1, 3).reshape(b * s, d))

    # proj_o fused with residual-add + LayerNorm (ln_attn).  Dropout = identity (eval).
    h1 = linear_residual_layernorm(attn_out, params["wo"], params["bo"],
                                   x2, params["ln1_g"], params["ln1_b"], eps=eps)

    # Position-wise feed-forward: expand + GELU, then contract fused with ln_ff.
    ff = linear(h1, params["w_ff"], params["b_ff"], activation="gelu")
    out = linear_residual_layernorm(ff, params["w_out"], params["b_out"],
                                    h1, params["ln2_g"], params["ln2_b"], eps=eps)

    return out.reshape(b, s, d), attn_probs.reshape(b, h, s, s)


# ----------------------------------------------------------------------------
# Pure-JAX reference (mirrors the PyTorch module, eval mode, tanh GELU)
# ----------------------------------------------------------------------------
def encoder_reference(x, params, *, n_heads, eps=1e-5):
    b, s, d = x.shape
    h = n_heads
    dk = d // h
    x2 = x.reshape(b * s, d)
    q = x2 @ params["wq"] + params["bq"]
    k = x2 @ params["wk"] + params["bk"]
    v = x2 @ params["wv"] + params["bv"]

    def split_heads(t):
        return t.reshape(b, s, h, dk).transpose(0, 2, 1, 3)

    qh, kh, vh = split_heads(q), split_heads(k), split_heads(v)
    scores = jnp.einsum("bhqd,bhkd->bhqk", qh, kh) / math.sqrt(d / h)
    probs = jax.nn.softmax(scores, axis=-1)
    ao = jnp.einsum("bhqk,bhkd->bhqd", probs, vh)
    ao = ao.transpose(0, 2, 1, 3).reshape(b * s, d)

    def layer_norm(r, g, bb):
        mean = jnp.mean(r, axis=-1, keepdims=True)
        var = jnp.mean((r - mean) ** 2, axis=-1, keepdims=True)
        return (r - mean) / jnp.sqrt(var + eps) * g + bb

    h1 = layer_norm(x2 + (ao @ params["wo"] + params["bo"]),
                    params["ln1_g"], params["ln1_b"])
    ff = _gelu(h1 @ params["w_ff"] + params["b_ff"])
    out = layer_norm(h1 + (ff @ params["w_out"] + params["b_out"]),
                     params["ln2_g"], params["ln2_b"])
    return out.reshape(b, s, d), probs


if __name__ == "__main__":
    # Small shapes consistent with the module: batch=2, seq=8, d_model=32, 4 heads, d_ff=64
    batch, seq, d_model, n_heads, d_ff = 2, 8, 32, 4, 64
    p_drop = 0.1  # unused: dropout is identity in eval mode (see TODO in the LN kernel)

    keys = jax.random.split(jax.random.PRNGKey(0), 13)

    def init_linear(kw, kb, fan_in, fan_out):
        w = jax.random.normal(kw, (fan_in, fan_out), jnp.float32) / math.sqrt(fan_in)
        bias = jax.random.normal(kb, (fan_out,), jnp.float32) * 0.02
        return w, bias

    wq, bq = init_linear(keys[0], keys[1], d_model, d_model)
    wk, bk = init_linear(keys[2], keys[3], d_model, d_model)
    wv, bv = init_linear(keys[4], keys[5], d_model, d_model)
    wo, bo = init_linear(keys[6], keys[7], d_model, d_model)
    w_ff, b_ff = init_linear(keys[8], keys[9], d_model, d_ff)
    w_out, b_out = init_linear(keys[10], keys[11], d_ff, d_model)

    params = dict(
        wq=wq, bq=bq, wk=wk, bk=bk, wv=wv, bv=bv, wo=wo, bo=bo,
        w_ff=w_ff, b_ff=b_ff, w_out=w_out, b_out=b_out,
        # nn.LayerNorm default init: weight = ones, bias = zeros
        ln1_g=jnp.ones((d_model,), jnp.float32),
        ln1_b=jnp.zeros((d_model,), jnp.float32),
        ln2_g=jnp.ones((d_model,), jnp.float32),
        ln2_b=jnp.zeros((d_model,), jnp.float32),
    )

    x = jax.random.normal(keys[12], (batch, seq, d_model), jnp.float32)

    out, scores = encoder_forward(x, params, n_heads=n_heads)
    jax.block_until_ready(out)
    jax.block_until_ready(scores)

    ref_out, ref_scores = encoder_reference(x, params, n_heads=n_heads)

    assert out.shape == (batch, seq, d_model)
    assert scores.shape == (batch, n_heads, seq, seq)
    # Tolerance allows for TPU MXU f32 matmul precision differences between the
    # Pallas kernels and the XLA reference path; structural errors are O(1).
    assert jnp.allclose(out, ref_out, atol=5e-2, rtol=5e-2), "encoder output mismatch"
    assert jnp.allclose(scores, ref_scores, atol=5e-2, rtol=5e-2), "attention scores mismatch"

    print("KERNEL_OK")
</pallas_src>

<mosaic_0001>
module attributes {stable_mosaic.version = 11 : i64} {
  func.func @_linear_kernel(%arg0: i32, %arg1: i32, %arg2: i32, %arg3: memref<16x32xf32, #tpu.memory_space<vmem>>, %arg4: memref<32x96xf32, #tpu.memory_space<vmem>>, %arg5: memref<1x96xf32, #tpu.memory_space<vmem>>, %arg6: memref<16x96xf32, #tpu.memory_space<vmem>>, %arg7: memref<16x96xf32, #tpu.memory_space<vmem>>) attributes {dimension_semantics = [#tpu.dimension_semantics<parallel>, #tpu.dimension_semantics<parallel>, #tpu.dimension_semantics<arbitrary>], iteration_bounds = array<i64: 1, 1, 1>, scalar_prefetch = 0 : i64, scratch_operands = 1 : i64, tpu.core_type = #tpu.core_type<tc>, window_params = [{transform_indices = @transform_0, window_bounds = array<i64: 16, 32>}, {transform_indices = @transform_1, window_bounds = array<i64: 32, 96>}, {transform_indices = @transform_2, window_bounds = array<i64: 1, 96>}, {transform_indices = @transform_3, window_bounds = array<i64: 16, 96>}]} {
    %c0_i32 = arith.constant 0 : i32
    %0 = arith.cmpi eq, %arg2, %c0_i32 : i32
    %1 = arith.extui %0 : i1 to i32
    %c0_i32_0 = arith.constant 0 : i32
    %2 = arith.cmpi ne, %1, %c0_i32_0 : i32
    scf.if %2 {
      %cst_10 = arith.constant 0.000000e+00 : f32
      %12 = vector.broadcast %cst_10 : f32 to vector<16x96xf32>
      %c0_11 = arith.constant 0 : index
      %c0_12 = arith.constant 0 : index
      %13 = vector.load %arg7[%c0_11, %c0_12] : memref<16x96xf32, #tpu.memory_space<vmem>>, vector<16x96xf32>
      tpu.vector_store %arg7[%c0_11, %c0_12], %12 {strides = array<i32>} : memref<16x96xf32, #tpu.memory_space<vmem>>, vector<16x96xf32>,
    } else {
    }
    %c0 = arith.constant 0 : index
    %c0_1 = arith.constant 0 : index
    %3 = vector.load %arg7[%c0, %c0_1] : memref<16x96xf32, #tpu.memory_space<vmem>>, vector<16x96xf32>
    %c0_2 = arith.constant 0 : index
    %c0_3 = arith.constant 0 : index
    %4 = vector.load %arg3[%c0_2, %c0_3] : memref<16x32xf32, #tpu.memory_space<vmem>>, vector<16x32xf32>
    %c0_4 = arith.constant 0 : index
    %c0_5 = arith.constant 0 : index
    %5 = vector.load %arg4[%c0_4, %c0_5] : memref<32x96xf32, #tpu.memory_space<vmem>>, vector<32x96xf32>
    %cst = arith.constant dense<0.000000e+00> : vector<16x96xf32>
    %6 = tpu.matmul %4, %5, %cst {dimension_numbers = #tpu.dot_dimension_numbers<[1], [0], [0], [1], [0, 0, 1, 1], [], []>} : vector<16x32xf32>, vector<32x96xf32>, vector<16x96xf32> -> vector<16x96xf32>
    %7 = arith.addf %3, %6 : vector<16x96xf32>
    %c0_6 = arith.constant 0 : index
    %c0_7 = arith.constant 0 : index
    %8 = vector.load %arg7[%c0_6, %c0_7] : memref<16x96xf32, #tpu.memory_space<vmem>>, vector<16x96xf32>
    tpu.vector_store %arg7[%c0_6, %c0_7], %7 {strides = array<i32>} : memref<16x96xf32, #tpu.memory_space<vmem>>, vector<16x96xf32>,
    %c0_i32_8 = arith.constant 0 : i32
    %9 = arith.cmpi eq, %arg2, %c0_i32_8 : i32
    %10 = arith.extui %9 : i1 to i32
    %c0_i32_9 = arith.constant 0 : i32
    %11 = arith.cmpi ne, %10, %c0_i32_9 : i32
    scf.if %11 {
      %c0_10 = arith.constant 0 : index
      %c0_11 = arith.constant 0 : index
      %12 = vector.load %arg7[%c0_10, %c0_11] : memref<16x96xf32, #tpu.memory_space<vmem>>, vector<16x96xf32>
      %c0_12 = arith.constant 0 : index
      %c0_13 = arith.constant 0 : index
      %13 = vector.load %arg5[%c0_12, %c0_13] : memref<1x96xf32, #tpu.memory_space<vmem>>, vector<1x96xf32>
      %14 = vector.broadcast %13 : vector<1x96xf32> to vector<16x96xf32>
      %15 = arith.addf %12, %14 : vector<16x96xf32>
      %c0_14 = arith.constant 0 : index
      %c0_15 = arith.constant 0 : index
      %16 = vector.load %arg6[%c0_14, %c0_15] : memref<16x96xf32, #tpu.memory_space<vmem>>, vector<16x96xf32>
      tpu.vector_store %arg6[%c0_14, %c0_15], %15 {strides = array<i32>} : memref<16x96xf32, #tpu.memory_space<vmem>>, vector<16x96xf32>,
    } else {
    }
    return
  }
  func.func @transform_0(%arg0: i32, %arg1: i32, %arg2: i32) -> (i32, i32) {
    %c0_i32 = arith.constant 0 : i32
    return %arg0, %arg2 : i32, i32
  }
  func.func @transform_1(%arg0: i32, %arg1: i32, %arg2: i32) -> (i32, i32) {
    %c0_i32 = arith.constant 0 : i32
    return %arg2, %arg1 : i32, i32
  }
  func.func @transform_2(%arg0: i32, %arg1: i32, %arg2: i32) -> (i32, i32) {
    %c0_i32 = arith.constant 0 : i32
    %c0_i32_0 = arith.constant 0 : i32
    return %c0_i32, %arg1 : i32, i32
  }
  func.func @transform_3(%arg0: i32, %arg1: i32, %arg2: i32) -> (i32, i32) {
    %c0_i32 = arith.constant 0 : i32
    return %arg0, %arg1 : i32, i32
  }
}

</mosaic_0001>

<llo_original>
// kernel: tpu_custom_call.1
$region0: #{tpu_custom_call.1}
  #allocation0 [shape = 'u32[]', space=smem, size = 0x4, offset = 0x4, fixed_abs, tag = 'smem constant byte address 0x4 - core index']
  #allocation1 [shape = 'u32[144,128]{1,0:T(1,128)}', space=vmem, size = 0x12000, scoped, tag = 'internal scratch']
  #allocation2 [shape = 'f32[16,96]{1,0:T(8,128)}', space=vmem, size = 0x2000, scoped, tag = 'scratch operand']
  %s0 = inlined_call_operand.hbm [shape: f32[16,32], index: 0, kind: input, shape index: {}]
  %s1 = inlined_call_operand.hbm [shape: f32[32,96], index: 1, kind: input, shape index: {}]
  %s2 = inlined_call_operand.vmem [shape: f32[1,96], index: 2, kind: input, shape index: {}]
  %s3 = inlined_call_operand.hbm [shape: f32[16,96], index: 3, kind: output, shape index: {}]
  %s4 = sld [smem:[#allocation0]]
  $region38: #{tpu_custom_call.1} parent=0
    _
  %s6 = ssub.s32 1, %s4
  %s7 = scalar_select 0, %s6, %s4
  $region1: #{tpu_custom_call.1} parent=0
    #allocation3 [shape = 'u8[8192]{0}', space=vmem, size = 0x2000, scoped, tag = 'input window, operand 0, single buffered']
    #allocation4 [shape = 's32[1]{0}', space=sflag, size = 0x4, scoped, tag = 'scoped memory for tpu_custom_call.1']
    #allocation5 [shape = 's32[1]{0}', space=sflag, size = 0x4, scoped, tag = 'scoped memory for tpu_custom_call.1']
    #allocation6 [shape = 'u8[16384]{0}', space=vmem, size = 0x4000, scoped, tag = 'input window, operand 1, single buffered']
    #allocation7 [shape = 's32[1]{0}', space=sflag, size = 0x4, scoped, tag = 'scoped memory for tpu_custom_call.1']
    #allocation8 [shape = 'u8[8192]{0}', space=vmem, size = 0x2000, scoped, tag = 'output window, operand 0, single buffered']
    %8 = vsyncpa [#allocation4], 0
    %9 = vsyncpa [#allocation7], 0
    %10 = vsyncpa [#allocation5], 0
    // Predicated region
    $region2: #{tpu_custom_call.1} parent=1 // pred_check
      _
    $region3: #{tpu_custom_call.1} parent=1 // pred_check_branch
      %12 = sbr.rel (0) target = $region5
    $region4: #{tpu_custom_call.1} parent=1 // pred_region
      %s14 = ssub.s32 256, 256
      %15 = vsyncadd [#allocation4], %s14
      %s16 = sshll.u32 [#allocation3], 4
      %s17 = int_to_ptr.vmem [resolvable:$true] %s16
      %22 = dma.hbm_to_vmem [thread:$0]  %s0, 256, %s17, [#allocation4], 128, 128, 8
    $region5: #{tpu_custom_call.1} parent=1 // pred_fallthru
      _
    // Predicated region
    $region6: #{tpu_custom_call.1} parent=1 // pred_check
      _
    $region7: #{tpu_custom_call.1} parent=1 // pred_check_branch
      %24 = sbr.rel (0) target = $region9
    $region8: #{tpu_custom_call.1} parent=1 // pred_region
      %s26 = ssub.s32 512, 512
      %27 = vsyncadd [#allocation7], %s26
      %s28 = sshll.u32 [#allocation6], 4
      %s29 = int_to_ptr.vmem [resolvable:$true] %s28
      %34 = dma.hbm_to_vmem [thread:$0]  %s1, 512, %s29, [#allocation7], 128, 128, 8
    $region9: #{tpu_custom_call.1} parent=1 // pred_fallthru
      _
    // Predicated region
    $region10: #{tpu_custom_call.1} parent=1 // pred_check
      _
    $region11: #{tpu_custom_call.1} parent=1 // pred_check_branch
      %36 = sbr.rel (0) target = $region13
    $region12: #{tpu_custom_call.1} parent=1 // pred_region
      _
    $region13: #{tpu_custom_call.1} parent=1 // pred_fallthru
      _
    // Predicated region
    $region14: #{tpu_custom_call.1} parent=1 // pred_check
      _
    $region15: #{tpu_custom_call.1} parent=1 // pred_check_branch
      %38 = sbr.rel (0) target = $region17
    $region16: #{tpu_custom_call.1} parent=1 // pred_region
      %39 = dma.done [#allocation4], 256
    $region17: #{tpu_custom_call.1} parent=1 // pred_fallthru
      _
    // Predicated region
    $region18: #{tpu_custom_call.1} parent=1 // pred_check
      _
    $region19: #{tpu_custom_call.1} parent=1 // pred_check_branch
      %41 = sbr.rel (0) target = $region21
    $region20: #{tpu_custom_call.1} parent=1 // pred_region
      %42 = dma.done [#allocation7], 512
    $region21: #{tpu_custom_call.1} parent=1 // pred_fallthru
      _
    %p43 = scmp.eq.s32.totalorder 0, 0
    // Predicated region
    $region22: #{tpu_custom_call.1} parent=1 // pred_check
      %p44 = pneg %p43
    $region23: #{tpu_custom_call.1} parent=1 // pred_check_branch
      %46 = sbr.rel (%p44) target = $region25
    $region24: #{tpu_custom_call.1} parent=1 // pred_region
      %vm47 = vcmask 785408
      %48 = vst.msk [vmem:[#allocation2] sm:$0xff] %vm47, 0.0
      %49 = vst.msk [vmem:[#allocation2 + $0x8] sm:$0xff] %vm47, 0.0
    $region25: #{tpu_custom_call.1} parent=1 // pred_fallthru
      _
    %v50 = vld [vmem:[#allocation2] sm:$0xff]
    %v51 = vld [vmem:[#allocation2 + $0x8] sm:$0xff]
    %v52 = vld [vmem:[#allocation3] sm:$0xff]
    %v53 = vld [vmem:[#allocation3 + $0x8] sm:$0xff]
    %v54 = vld [vmem:[#allocation6] sm:$0xff]
    %v55 = vld [vmem:[#allocation6 + $0x8] sm:$0xff]
    %v56 = vld [vmem:[#allocation6 + $0x10] sm:$0xff]
    %v57 = vld [vmem:[#allocation6 + $0x18] sm:$0xff]
    %vm58 = vcmask 261120
    %v60 = vsel %vm58, %v52, 0
    %v63 = vsel %vm58, %v53, 0
    %65 = vmatprep.subr.mxu0 0.0
    %66 = vmatpush1.msra.mxu0 %v54
    %67 = vmatprep.subr.mxu0 0.0
    %68 = vmatpush1.msra.mxu0 %v55
    %69 = vmatprep.subr.mxu0 0.0
    %70 = vmatpush1.msra.mxu0 %v56
    %71 = vmatprep.subr.mxu0 0.0
    %72 = vmatpush1.msra.mxu0 %v57
    %73 = vmatprep.subr.mxu0 0.0
    %74 = vmatpush1.msra.mxu0 0.0
    %75 = vmatprep.subr.mxu0 0.0
    %76 = vmatpush1.msra.mxu0 0.0
    %77 = vmatprep.subr.mxu0 0.0
    %78 = vmatpush1.msra.mxu0 0.0
    %79 = vmatprep.subr.mxu0 0.0
    %80 = vmatpush1.msra.mxu0 0.0
    %81 = vmatprep.subr.mxu0 0.0
    %82 = vmatpush1.msra.mxu0 0.0
    %83 = vmatprep.subr.mxu0 0.0
    %84 = vmatpush1.msra.mxu0 0.0
    %85 = vmatprep.subr.mxu0 0.0
    %86 = vmatpush1.msra.mxu0 0.0
    %87 = vmatprep.subr.mxu0 0.0
    %88 = vmatpush1.msra.mxu0 0.0
    %89 = vmatprep.subr.mxu0 0.0
    %90 = vmatpush1.msra.mxu0 0.0
    %91 = vmatprep.subr.mxu0 0.0
    %92 = vmatpush1.msra.mxu0 0.0
    %93 = vmatprep.subr.mxu0 0.0
    %94 = vmatpush1.msra.mxu0 0.0
    %95 = vmatprep.subr.mxu0 0.0
    %96 = vmatpush1.msra.mxu0 0.0
    %97 = vmatprep.subr.mxu0 0.0
    %98 = vmatpush1.msra.mxu0 0.0
    %99 = vmatprep.subr.mxu0 0.0
    %100 = vmatpush1.msra.mxu0 0.0
    %101 = vmatprep.subr.mxu0 0.0
    %102 = vmatpush1.msra.mxu0 0.0
    %103 = vmatprep.subr.mxu0 0.0
    %104 = vmatpush1.msra.mxu0 0.0
    %105 = vmatprep.subr.mxu0 0.0
    %106 = vmatpush1.msra.mxu0 0.0
    %107 = vmatprep.subr.mxu0 0.0
    %108 = vmatpush1.msra.mxu0 0.0
    %109 = vmatprep.subr.mxu0 0.0
    %110 = vmatpush1.msra.mxu0 0.0
    %111 = vmatprep.subr.mxu0 0.0
    %112 = vmatpush1.msra.mxu0 0.0
    %113 = vmatprep.subr.mxu0 0.0
    %114 = vmatpush1.msra.mxu0 0.0
    %115 = vmatprep.subr.mxu0 0.0
    %116 = vmatpush1.msra.mxu0 0.0
    %117 = vmatprep.subr.mxu0 0.0
    %118 = vmatpush1.msra.mxu0 0.0
    %119 = vmatprep.subr.mxu0 0.0
    %120 = vmatpush1.msra.mxu0 0.0
    %121 = vmatprep.subr.mxu0 0.0
    %122 = vmatpush1.msra.mxu0 0.0
    %123 = vmatprep.subr.mxu0 0.0
    %124 = vmatpush1.msra.mxu0 0.0
    %125 = vmatprep.subr.mxu0 0.0
    %126 = vmatpush1.msra.mxu0 0.0
    %127 = vmatprep.subr.mxu0 0.0
    %128 = vmatpush1.msra.mxu0 0.0
    %129 = vmatprep.mubr.f32.mxu0 0.0
    %130 = vmatmul.mubr.f32.gmra.mrb[0].mxu0 %v60
    %v131 = vpop.f32.mrb[0].mxu0
    %v132 = vadd.f32 0.0, %v131
    %v133 = vpop.f32.mrb[0].mxu0
    %134 = vmatprep.mubr.f32.mxu0 0.0
    %135 = vmatmul.mubr.f32.gmra.mrb[0].mxu0 %v63
    %v136 = vpop.f32.mrb[0].mxu0
    %v137 = vadd.f32 0.0, %v136
    %v138 = vpop.f32.mrb[0].mxu0
    %139 = vdwg.mxu0
    %v140 = vadd.f32 %v50, %v132
    %v141 = vadd.f32 %v51, %v137
    %vm142 = vcmask 785408
    %143 = vst.msk [vmem:[#allocation2] sm:$0xff] %vm142, %v140
    %144 = vst.msk [vmem:[#allocation2 + $0x8] sm:$0xff] %vm142, %v141
    // Predicated region
    $region26: #{tpu_custom_call.1} parent=1 // pred_check
      %p145 = pneg %p43
    $region27: #{tpu_custom_call.1} parent=1 // pred_check_branch
      %147 = sbr.rel (%p145) target = $region29
    $region28: #{tpu_custom_call.1} parent=1 // pred_region
      %v148 = vld [vmem:[#allocation2] sm:$0xff]
      %v149 = vld [vmem:[#allocation2 + $0x8] sm:$0xff]
      %v150 = vld [vmem:[%s2] sm:$0x1]
      %v152 = vlaneseq
      %v153 = vshrl.u32 %v152, 7
      %v154 = vsub.s32 0, %v153
      %v155 = vrot.slane %v150, %v154
      %v157 = vadd.f32 %v148, %v155
      %v158 = vadd.f32 %v149, %v155
      %159 = vst.msk [vmem:[#allocation8] sm:$0xff] %vm142, %v157
      %160 = vst.msk [vmem:[#allocation8 + $0x8] sm:$0xff] %vm142, %v158
    $region29: #{tpu_custom_call.1} parent=1 // pred_fallthru
      _
    // Predicated region
    $region30: #{tpu_custom_call.1} parent=1 // pred_check
      _
    $region31: #{tpu_custom_call.1} parent=1 // pred_check_branch
      %162 = sbr.rel (0) target = $region33
    $region32: #{tpu_custom_call.1} parent=1 // pred_region
      %s164 = ssub.s32 256, 256
      %165 = vsyncadd [#allocation5], %s164
      %s166 = sshll.u32 [#allocation8], 4
      %s167 = int_to_ptr.vmem [resolvable:$true] %s166
      %172 = dma.vmem_to_hbm [thread:$0]  %s167, 256, %s3, [#allocation5], 128, 128, 8
    $region33: #{tpu_custom_call.1} parent=1 // pred_fallthru
      _
    // Predicated region
    $region34: #{tpu_custom_call.1} parent=1 // pred_check
      _
    $region35: #{tpu_custom_call.1} parent=1 // pred_check_branch
      %174 = sbr.rel (0) target = $region37
    $region36: #{tpu_custom_call.1} parent=1 // pred_region
      %175 = dma.done [#allocation5], 256
    $region37: #{tpu_custom_call.1} parent=1 // pred_fallthru
      _
    %176 = vsyncpa [#allocation4], 1
    %177 = vsyncpa [#allocation7], 1
    %178 = vsyncpa [#allocation5], 1

</llo_original>
